<compile_context>
chip_gen: v7x
topology: tpu7x:2x2x1
jax: 0.10.0
libtpu: 0.0.40
codegen_flags: <defaults>
</compile_context>

<pallas_src>
import functools

import jax
import jax.numpy as jnp
from jax.experimental import pallas as pl
from jax.experimental.pallas import tpu as pltpu

LANES = 128          # lane width: all feature dims are padded to this
IN_DIM = 23
H1, H2 = 15, 8


def _german_kernel(scal_ref, x_ref, w_ref, p_ref, z_ref, out_ref, xpad_ref):
    """Whole forward pass in one kernel invocation.

    scal_ref : SMEM (3,)  f32      -> PReLU alphas [a1, a2, a3]
    x_ref    : VMEM (B, 23) f32    -> raw input (padded to 128 lanes in-kernel)
    w_ref    : VMEM (4, 128, 128)  -> [W1, W2, W3, Wc], zero-padded
    p_ref    : VMEM (8, 128)       -> packed per-feature rows (BN gamma/beta, class bias)
    z_ref    : VMEM (B, 128)       -> embedding z (padded)
    out_ref  : VMEM (B, 128)       -> log_softmax(logits) (padded)
    xpad_ref : VMEM (B, 128) scratch for the zero-padded input
    """
    eps = jnp.float32(1e-5)

    a1 = scal_ref[0]
    a2 = scal_ref[1]
    a3 = scal_ref[2]

    # --- zero-pad the input to 128 lanes inside VMEM (no HBM copy) ---
    xpad_ref[...] = jnp.zeros_like(xpad_ref)
    xpad_ref[:, :IN_DIM] = x_ref[...]
    x = xpad_ref[...]                    # (B, 128) f32, zeros past column 23

    P = p_ref[...]                       # (8, 128) f32 -- one load, sliced below

    def bn(v, g, b=None):
        # Training-mode BatchNorm1d: biased batch stats, two-pass variance,
        # then a single scale/shift application per element.
        m = jnp.mean(v, axis=0, keepdims=True)          # (1, 128)
        c = v - m
        var = jnp.mean(c * c, axis=0, keepdims=True)    # (1, 128)
        scale = g * jax.lax.rsqrt(var + eps)            # row math only
        out = c * scale
        if b is not None:
            out = out + b
        return out

    def prelu(v, a):
        return jnp.where(v > 0, v, a * v)

    # --- Linear(23,15) [bias cancelled by BN mean-sub], BN(15), PReLU ---
    h = jnp.dot(x, w_ref[0], preferred_element_type=jnp.float32)
    h = prelu(bn(h, P[0:1, :], P[1:2, :]), a1)

    # --- Linear(15,8) [bias cancelled], BN(8), PReLU ---
    h = jnp.dot(h, w_ref[1], preferred_element_type=jnp.float32)
    h = prelu(bn(h, P[2:3, :], P[3:4, :]), a2)

    # --- second BN(8) [beta cancelled downstream through bias-free Linear3 + BN4] ---
    h = bn(h, P[4:5, :])

    # --- Linear(8, 64, bias=False), BN(64), PReLU  -> z ---
    h = jnp.dot(h, w_ref[2], preferred_element_type=jnp.float32)
    z = prelu(bn(h, P[5:6, :], P[6:7, :]), a3)
    z_ref[...] = z

    # --- classlayer: Linear(64, C); padded class lanes get -1e30 bias ---
    logits = jnp.dot(z, w_ref[3], preferred_element_type=jnp.float32) + P[7:8, :]

    # --- log_softmax over classes (axis=1); softmax derived exactly outside ---
    m = jnp.max(logits, axis=1, keepdims=True)
    shifted = logits - m
    s = jnp.sum(jnp.exp(shifted), axis=1, keepdims=True)
    out_ref[...] = shifted - jnp.log(s)


@functools.partial(jax.jit, static_argnames=("num_classes", "embed_length"))
def german_net_forward(x, packed, num_classes=2, embed_length=64):
    """Returns (out, z, prob) like the PyTorch module's forward."""
    B = x.shape[0]
    x = x.astype(jnp.float32)

    vmem = pl.BlockSpec(memory_space=pltpu.MemorySpace.VMEM)
    smem = pl.BlockSpec(memory_space=pltpu.MemorySpace.SMEM)

    z_pad, out_pad = pl.pallas_call(
        _german_kernel,
        out_shape=(
            jax.ShapeDtypeStruct((B, LANES), jnp.float32),   # z (padded)
            jax.ShapeDtypeStruct((B, LANES), jnp.float32),   # log_softmax (padded)
        ),
        in_specs=[smem, vmem, vmem, vmem],
        out_specs=(vmem, vmem),
        scratch_shapes=[pltpu.VMEM((B, LANES), jnp.float32)],
    )(packed["alphas"], x, packed["w"], packed["p"])

    out = out_pad[:, :num_classes]
    z = z_pad[:, :embed_length]
    prob = jnp.exp(out)        # exact: softmax == exp(log_softmax)
    return out, z, prob


def init_params(key, num_classes=2, embed_length=64):
    """PyTorch-default-style init; returns (packed kernel params, raw reference params)."""
    assert num_classes <= LANES and embed_length <= LANES
    keys = jax.random.split(key, 7)

    def lin_w(k, fan_in, fan_out):
        bound = 1.0 / jnp.sqrt(jnp.float32(fan_in))
        return jax.random.uniform(k, (fan_in, fan_out), jnp.float32, -bound, bound)

    def lin_b(k, fan_in, fan_out):
        bound = 1.0 / jnp.sqrt(jnp.float32(fan_in))
        return jax.random.uniform(k, (fan_out,), jnp.float32, -bound, bound)

    w1 = lin_w(keys[0], IN_DIM, H1); b1 = lin_b(keys[1], IN_DIM, H1)
    w2 = lin_w(keys[2], H1, H2);     b2 = lin_b(keys[3], H1, H2)
    w3 = lin_w(keys[4], H2, embed_length)                                # bias=False
    wc = lin_w(keys[5], embed_length, num_classes)
    bc = lin_b(keys[6], embed_length, num_classes)

    def pad_w(w):
        fi, fo = w.shape
        return jnp.pad(w, ((0, LANES - fi), (0, LANES - fo)))

    # One (4, 128, 128) weight slab: [W1, W2, W3, Wc].
    w_packed = jnp.stack([pad_w(w1), pad_w(w2), pad_w(w3), pad_w(wc)], axis=0)

    def row(v, fill=0.0):
        r = jnp.full((LANES,), fill, jnp.float32)
        return r.at[: v.shape[0]].set(v)

    ones = jnp.ones
    zeros = jnp.zeros
    # Dead terms (Linear1/Linear2 biases, BN3 beta) are intentionally NOT packed.
    rows = [
        row(ones((H1,), jnp.float32)),                         # 0: BN1 gamma
        row(zeros((H1,), jnp.float32)),                        # 1: BN1 beta
        row(ones((H2,), jnp.float32)),                         # 2: BN2 gamma
        row(zeros((H2,), jnp.float32)),                        # 3: BN2 beta
        row(ones((H2,), jnp.float32)),                         # 4: BN3 gamma
        row(ones((embed_length,), jnp.float32)),               # 5: BN4 gamma
        row(zeros((embed_length,), jnp.float32)),              # 6: BN4 beta
        row(bc, fill=-1e30),                                   # 7: class bias (-1e30 masks padded class lanes)
    ]
    p_packed = jnp.stack(rows, axis=0)                         # (8, 128): one clean sublane tile

    alphas = jnp.full((3,), 0.25, jnp.float32)                 # PReLU default init

    packed = {"w": w_packed, "p": p_packed, "alphas": alphas}
    ref = {"w1": w1, "b1": b1, "w2": w2, "b2": b2, "w3": w3, "wc": wc, "bc": bc}
    return packed, ref


def reference_forward(x, ref):
    """Pure-JAX reference of the PyTorch forward (training-mode BN, fresh module).

    Keeps the Linear biases and BN3 beta that the kernel drops, to demonstrate
    they are mathematically cancelled by the following BN layers."""
    eps = 1e-5

    def bn(v):
        m = jnp.mean(v, axis=0, keepdims=True)
        var = jnp.mean((v - m) ** 2, axis=0, keepdims=True)
        return (v - m) / jnp.sqrt(var + eps)

    def prelu(v, a=0.25):
        return jnp.where(v > 0, v, a * v)

    h = x @ ref["w1"] + ref["b1"]
    h = prelu(bn(h))
    h = h @ ref["w2"] + ref["b2"]
    h = prelu(bn(h))
    h = bn(h)                       # beta = 0 (default init)
    h = h @ ref["w3"]
    z = prelu(bn(h))
    logits = z @ ref["wc"] + ref["bc"]
    prob = jax.nn.softmax(logits, axis=1)
    out = jax.nn.log_softmax(logits, axis=1)
    return out, z, prob


if __name__ == "__main__":
    B, C, E = 8, 2, 64

    key = jax.random.PRNGKey(0)
    kx, kp = jax.random.split(key)
    x = jax.random.normal(kx, (B, IN_DIM), jnp.float32)
    packed, raw = init_params(kp, num_classes=C, embed_length=E)

    out, z, prob = german_net_forward(x, packed, num_classes=C, embed_length=E)
    jax.block_until_ready((out, z, prob))

    assert out.shape == (B, C) and z.shape == (B, E) and prob.shape == (B, C)

    out_r, z_r, prob_r = reference_forward(x, raw)
    assert jnp.allclose(jnp.sum(prob, axis=1), 1.0, atol=2e-3)
    assert jnp.allclose(z, z_r, atol=2e-3, rtol=2e-3)
    assert jnp.allclose(prob, prob_r, atol=2e-3, rtol=2e-3)
    assert jnp.allclose(out, out_r, atol=2e-3, rtol=2e-3)

    print("KERNEL_OK")
</pallas_src>

<mosaic_0001>
module attributes {stable_mosaic.version = 11 : i64} {
  func.func @_german_kernel(%arg0: memref<3xf32, #tpu.memory_space<smem>>, %arg1: memref<8x23xf32, #tpu.memory_space<vmem>>, %arg2: memref<4x128x128xf32, #tpu.memory_space<vmem>>, %arg3: memref<8x128xf32, #tpu.memory_space<vmem>>, %arg4: memref<8x128xf32, #tpu.memory_space<vmem>>, %arg5: memref<8x128xf32, #tpu.memory_space<vmem>>, %arg6: memref<8x128xf32, #tpu.memory_space<vmem>>) attributes {dimension_semantics = [], scalar_prefetch = 0 : i64, scratch_operands = 1 : i64, tpu.core_type = #tpu.core_type<tc>} {
    %c0 = arith.constant 0 : index
    %0 = memref.load %arg0[%c0] : memref<3xf32, #tpu.memory_space<smem>>
    %c1 = arith.constant 1 : index
    %1 = memref.load %arg0[%c1] : memref<3xf32, #tpu.memory_space<smem>>
    %c2 = arith.constant 2 : index
    %2 = memref.load %arg0[%c2] : memref<3xf32, #tpu.memory_space<smem>>
    %cst = arith.constant 0.000000e+00 : f32
    %3 = vector.broadcast %cst : f32 to vector<8x128xf32>
    %c0_0 = arith.constant 0 : index
    %c0_1 = arith.constant 0 : index
    %4 = vector.load %arg6[%c0_0, %c0_1] : memref<8x128xf32, #tpu.memory_space<vmem>>, vector<8x128xf32>
    tpu.vector_store %arg6[%c0_0, %c0_1], %3 {strides = array<i32>} : memref<8x128xf32, #tpu.memory_space<vmem>>, vector<8x128xf32>,
    %c0_2 = arith.constant 0 : index
    %c0_3 = arith.constant 0 : index
    %5 = vector.load %arg1[%c0_2, %c0_3] : memref<8x23xf32, #tpu.memory_space<vmem>>, vector<8x23xf32>
    %c0_4 = arith.constant 0 : index
    %c0_5 = arith.constant 0 : index
    %6 = vector.load %arg6[%c0_4, %c0_5] : memref<8x128xf32, #tpu.memory_space<vmem>>, vector<8x23xf32>
    tpu.vector_store %arg6[%c0_4, %c0_5], %5 {strides = array<i32>} : memref<8x128xf32, #tpu.memory_space<vmem>>, vector<8x23xf32>,
    %c0_6 = arith.constant 0 : index
    %c0_7 = arith.constant 0 : index
    %7 = vector.load %arg6[%c0_6, %c0_7] : memref<8x128xf32, #tpu.memory_space<vmem>>, vector<8x128xf32>
    %c0_8 = arith.constant 0 : index
    %c0_9 = arith.constant 0 : index
    %8 = vector.load %arg3[%c0_8, %c0_9] : memref<8x128xf32, #tpu.memory_space<vmem>>, vector<8x128xf32>
    %c0_10 = arith.constant 0 : index
    %c0_11 = arith.constant 0 : index
    %c0_12 = arith.constant 0 : index
    %9 = vector.load %arg2[%c0_10, %c0_11, %c0_12] : memref<4x128x128xf32, #tpu.memory_space<vmem>>, vector<1x128x128xf32>
    %10 = vector.shape_cast %9 : vector<1x128x128xf32> to vector<128x128xf32>
    %cst_13 = arith.constant dense<0.000000e+00> : vector<8x128xf32>
    %11 = tpu.matmul %7, %10, %cst_13 {dimension_numbers = #tpu.dot_dimension_numbers<[1], [0], [0], [1], [0, 0, 1, 1], [], []>} : vector<8x128xf32>, vector<128x128xf32>, vector<8x128xf32> -> vector<8x128xf32>
    %12 = vector.extract_strided_slice %8 {offsets = [0, 0], sizes = [1, 128], strides = [1, 1]} : vector<8x128xf32> to vector<1x128xf32>
    %13 = vector.extract_strided_slice %8 {offsets = [1, 0], sizes = [1, 128], strides = [1, 1]} : vector<8x128xf32> to vector<1x128xf32>
    %cst_14 = arith.constant dense<0.000000e+00> : vector<128xf32>
    %14 = vector.multi_reduction <add>, %11, %cst_14 [0] : vector<8x128xf32> to vector<128xf32>
    %15 = vector.shape_cast %14 : vector<128xf32> to vector<1x128xf32>
    %cst_15 = arith.constant 8.000000e+00 : f32
    %16 = vector.broadcast %cst_15 : f32 to vector<1x128xf32>
    %17 = arith.divf %15, %16 : vector<1x128xf32>
    %18 = vector.broadcast %17 : vector<1x128xf32> to vector<8x128xf32>
    %19 = arith.subf %11, %18 : vector<8x128xf32>
    %20 = arith.mulf %19, %19 : vector<8x128xf32>
    %cst_16 = arith.constant dense<0.000000e+00> : vector<128xf32>
    %21 = vector.multi_reduction <add>, %20, %cst_16 [0] : vector<8x128xf32> to vector<128xf32>
    %22 = vector.shape_cast %21 : vector<128xf32> to vector<1x128xf32>
    %cst_17 = arith.constant 8.000000e+00 : f32
    %23 = vector.broadcast %cst_17 : f32 to vector<1x128xf32>
    %24 = arith.divf %22, %23 : vector<1x128xf32>
    %cst_18 = arith.constant 9.99999974E-6 : f32
    %25 = vector.broadcast %cst_18 : f32 to vector<1x128xf32>
    %26 = arith.addf %24, %25 : vector<1x128xf32>
    %27 = math.rsqrt %26 : vector<1x128xf32>
    %28 = arith.mulf %12, %27 : vector<1x128xf32>
    %29 = vector.broadcast %28 : vector<1x128xf32> to vector<8x128xf32>
    %30 = arith.mulf %19, %29 : vector<8x128xf32>
    %31 = vector.broadcast %13 : vector<1x128xf32> to vector<8x128xf32>
    %32 = arith.addf %30, %31 : vector<8x128xf32>
    %cst_19 = arith.constant 0.000000e+00 : f32
    %33 = vector.broadcast %cst_19 : f32 to vector<8x128xf32>
    %34 = arith.cmpf ogt, %32, %33 : vector<8x128xf32>
    %35 = vector.broadcast %0 : f32 to vector<8x128xf32>
    %36 = arith.mulf %35, %32 : vector<8x128xf32>
    %37 = arith.select %34, %32, %36 : vector<8x128xi1>, vector<8x128xf32>
    %c1_20 = arith.constant 1 : index
    %c0_21 = arith.constant 0 : index
    %c0_22 = arith.constant 0 : index
    %38 = vector.load %arg2[%c1_20, %c0_21, %c0_22] : memref<4x128x128xf32, #tpu.memory_space<vmem>>, vector<1x128x128xf32>
    %39 = vector.shape_cast %38 : vector<1x128x128xf32> to vector<128x128xf32>
    %cst_23 = arith.constant dense<0.000000e+00> : vector<8x128xf32>
    %40 = tpu.matmul %37, %39, %cst_23 {dimension_numbers = #tpu.dot_dimension_numbers<[1], [0], [0], [1], [0, 0, 1, 1], [], []>} : vector<8x128xf32>, vector<128x128xf32>, vector<8x128xf32> -> vector<8x128xf32>
    %41 = vector.extract_strided_slice %8 {offsets = [2, 0], sizes = [1, 128], strides = [1, 1]} : vector<8x128xf32> to vector<1x128xf32>
    %42 = vector.extract_strided_slice %8 {offsets = [3, 0], sizes = [1, 128], strides = [1, 1]} : vector<8x128xf32> to vector<1x128xf32>
    %cst_24 = arith.constant dense<0.000000e+00> : vector<128xf32>
    %43 = vector.multi_reduction <add>, %40, %cst_24 [0] : vector<8x128xf32> to vector<128xf32>
    %44 = vector.shape_cast %43 : vector<128xf32> to vector<1x128xf32>
    %cst_25 = arith.constant 8.000000e+00 : f32
    %45 = vector.broadcast %cst_25 : f32 to vector<1x128xf32>
    %46 = arith.divf %44, %45 : vector<1x128xf32>
    %47 = vector.broadcast %46 : vector<1x128xf32> to vector<8x128xf32>
    %48 = arith.subf %40, %47 : vector<8x128xf32>
    %49 = arith.mulf %48, %48 : vector<8x128xf32>
    %cst_26 = arith.constant dense<0.000000e+00> : vector<128xf32>
    %50 = vector.multi_reduction <add>, %49, %cst_26 [0] : vector<8x128xf32> to vector<128xf32>
    %51 = vector.shape_cast %50 : vector<128xf32> to vector<1x128xf32>
    %cst_27 = arith.constant 8.000000e+00 : f32
    %52 = vector.broadcast %cst_27 : f32 to vector<1x128xf32>
    %53 = arith.divf %51, %52 : vector<1x128xf32>
    %cst_28 = arith.constant 9.99999974E-6 : f32
    %54 = vector.broadcast %cst_28 : f32 to vector<1x128xf32>
    %55 = arith.addf %53, %54 : vector<1x128xf32>
    %56 = math.rsqrt %55 : vector<1x128xf32>
    %57 = arith.mulf %41, %56 : vector<1x128xf32>
    %58 = vector.broadcast %57 : vector<1x128xf32> to vector<8x128xf32>
    %59 = arith.mulf %48, %58 : vector<8x128xf32>
    %60 = vector.broadcast %42 : vector<1x128xf32> to vector<8x128xf32>
    %61 = arith.addf %59, %60 : vector<8x128xf32>
    %cst_29 = arith.constant 0.000000e+00 : f32
    %62 = vector.broadcast %cst_29 : f32 to vector<8x128xf32>
    %63 = arith.cmpf ogt, %61, %62 : vector<8x128xf32>
    %64 = vector.broadcast %1 : f32 to vector<8x128xf32>
    %65 = arith.mulf %64, %61 : vector<8x128xf32>
    %66 = arith.select %63, %61, %65 : vector<8x128xi1>, vector<8x128xf32>
    %67 = vector.extract_strided_slice %8 {offsets = [4, 0], sizes = [1, 128], strides = [1, 1]} : vector<8x128xf32> to vector<1x128xf32>
    %cst_30 = arith.constant dense<0.000000e+00> : vector<128xf32>
    %68 = vector.multi_reduction <add>, %66, %cst_30 [0] : vector<8x128xf32> to vector<128xf32>
    %69 = vector.shape_cast %68 : vector<128xf32> to vector<1x128xf32>
    %cst_31 = arith.constant 8.000000e+00 : f32
    %70 = vector.broadcast %cst_31 : f32 to vector<1x128xf32>
    %71 = arith.divf %69, %70 : vector<1x128xf32>
    %72 = vector.broadcast %71 : vector<1x128xf32> to vector<8x128xf32>
    %73 = arith.subf %66, %72 : vector<8x128xf32>
    %74 = arith.mulf %73, %73 : vector<8x128xf32>
    %cst_32 = arith.constant dense<0.000000e+00> : vector<128xf32>
    %75 = vector.multi_reduction <add>, %74, %cst_32 [0] : vector<8x128xf32> to vector<128xf32>
    %76 = vector.shape_cast %75 : vector<128xf32> to vector<1x128xf32>
    %cst_33 = arith.constant 8.000000e+00 : f32
    %77 = vector.broadcast %cst_33 : f32 to vector<1x128xf32>
    %78 = arith.divf %76, %77 : vector<1x128xf32>
    %cst_34 = arith.constant 9.99999974E-6 : f32
    %79 = vector.broadcast %cst_34 : f32 to vector<1x128xf32>
    %80 = arith.addf %78, %79 : vector<1x128xf32>
    %81 = math.rsqrt %80 : vector<1x128xf32>
    %82 = arith.mulf %67, %81 : vector<1x128xf32>
    %83 = vector.broadcast %82 : vector<1x128xf32> to vector<8x128xf32>
    %84 = arith.mulf %73, %83 : vector<8x128xf32>
    %c2_35 = arith.constant 2 : index
    %c0_36 = arith.constant 0 : index
    %c0_37 = arith.constant 0 : index
    %85 = vector.load %arg2[%c2_35, %c0_36, %c0_37] : memref<4x128x128xf32, #tpu.memory_space<vmem>>, vector<1x128x128xf32>
    %86 = vector.shape_cast %85 : vector<1x128x128xf32> to vector<128x128xf32>
    %cst_38 = arith.constant dense<0.000000e+00> : vector<8x128xf32>
    %87 = tpu.matmul %84, %86, %cst_38 {dimension_numbers = #tpu.dot_dimension_numbers<[1], [0], [0], [1], [0, 0, 1, 1], [], []>} : vector<8x128xf32>, vector<128x128xf32>, vector<8x128xf32> -> vector<8x128xf32>
    %88 = vector.extract_strided_slice %8 {offsets = [5, 0], sizes = [1, 128], strides = [1, 1]} : vector<8x128xf32> to vector<1x128xf32>
    %89 = vector.extract_strided_slice %8 {offsets = [6, 0], sizes = [1, 128], strides = [1, 1]} : vector<8x128xf32> to vector<1x128xf32>
    %cst_39 = arith.constant dense<0.000000e+00> : vector<128xf32>
    %90 = vector.multi_reduction <add>, %87, %cst_39 [0] : vector<8x128xf32> to vector<128xf32>
    %91 = vector.shape_cast %90 : vector<128xf32> to vector<1x128xf32>
    %cst_40 = arith.constant 8.000000e+00 : f32
    %92 = vector.broadcast %cst_40 : f32 to vector<1x128xf32>
    %93 = arith.divf %91, %92 : vector<1x128xf32>
    %94 = vector.broadcast %93 : vector<1x128xf32> to vector<8x128xf32>
    %95 = arith.subf %87, %94 : vector<8x128xf32>
    %96 = arith.mulf %95, %95 : vector<8x128xf32>
    %cst_41 = arith.constant dense<0.000000e+00> : vector<128xf32>
    %97 = vector.multi_reduction <add>, %96, %cst_41 [0] : vector<8x128xf32> to vector<128xf32>
    %98 = vector.shape_cast %97 : vector<128xf32> to vector<1x128xf32>
    %cst_42 = arith.constant 8.000000e+00 : f32
    %99 = vector.broadcast %cst_42 : f32 to vector<1x128xf32>
    %100 = arith.divf %98, %99 : vector<1x128xf32>
    %cst_43 = arith.constant 9.99999974E-6 : f32
    %101 = vector.broadcast %cst_43 : f32 to vector<1x128xf32>
    %102 = arith.addf %100, %101 : vector<1x128xf32>
    %103 = math.rsqrt %102 : vector<1x128xf32>
    %104 = arith.mulf %88, %103 : vector<1x128xf32>
    %105 = vector.broadcast %104 : vector<1x128xf32> to vector<8x128xf32>
    %106 = arith.mulf %95, %105 : vector<8x128xf32>
    %107 = vector.broadcast %89 : vector<1x128xf32> to vector<8x128xf32>
    %108 = arith.addf %106, %107 : vector<8x128xf32>
    %cst_44 = arith.constant 0.000000e+00 : f32
    %109 = vector.broadcast %cst_44 : f32 to vector<8x128xf32>
    %110 = arith.cmpf ogt, %108, %109 : vector<8x128xf32>
    %111 = vector.broadcast %2 : f32 to vector<8x128xf32>
    %112 = arith.mulf %111, %108 : vector<8x128xf32>
    %113 = arith.select %110, %108, %112 : vector<8x128xi1>, vector<8x128xf32>
    %c0_45 = arith.constant 0 : index
    %c0_46 = arith.constant 0 : index
    %114 = vector.load %arg4[%c0_45, %c0_46] : memref<8x128xf32, #tpu.memory_space<vmem>>, vector<8x128xf32>
    tpu.vector_store %arg4[%c0_45, %c0_46], %113 {strides = array<i32>} : memref<8x128xf32, #tpu.memory_space<vmem>>, vector<8x128xf32>,
    %c3 = arith.constant 3 : index
    %c0_47 = arith.constant 0 : index
    %c0_48 = arith.constant 0 : index
    %115 = vector.load %arg2[%c3, %c0_47, %c0_48] : memref<4x128x128xf32, #tpu.memory_space<vmem>>, vector<1x128x128xf32>
    %116 = vector.shape_cast %115 : vector<1x128x128xf32> to vector<128x128xf32>
    %cst_49 = arith.constant dense<0.000000e+00> : vector<8x128xf32>
    %117 = tpu.matmul %113, %116, %cst_49 {dimension_numbers = #tpu.dot_dimension_numbers<[1], [0], [0], [1], [0, 0, 1, 1], [], []>} : vector<8x128xf32>, vector<128x128xf32>, vector<8x128xf32> -> vector<8x128xf32>
    %118 = vector.extract_strided_slice %8 {offsets = [7, 0], sizes = [1, 128], strides = [1, 1]} : vector<8x128xf32> to vector<1x128xf32>
    %119 = vector.broadcast %118 : vector<1x128xf32> to vector<8x128xf32>
    %120 = arith.addf %117, %119 : vector<8x128xf32>
    %cst_50 = arith.constant dense<0xFF800000> : vector<8xf32>
    %121 = vector.multi_reduction <maximumf>, %120, %cst_50 [1] : vector<8x128xf32> to vector<8xf32>
    %122 = vector.shape_cast %121 : vector<8xf32> to vector<8x1xf32>
    %123 = vector.broadcast %122 : vector<8x1xf32> to vector<8x128xf32>
    %124 = arith.subf %120, %123 : vector<8x128xf32>
    %125 = math.exp %124 : vector<8x128xf32>
    %cst_51 = arith.constant dense<0.000000e+00> : vector<8xf32>
    %126 = vector.multi_reduction <add>, %125, %cst_51 [1] : vector<8x128xf32> to vector<8xf32>
    %127 = vector.shape_cast %126 : vector<8xf32> to vector<8x1xf32>
    %128 = math.log %127 : vector<8x1xf32>
    %129 = vector.broadcast %128 : vector<8x1xf32> to vector<8x128xf32>
    %130 = arith.subf %124, %129 : vector<8x128xf32>
    %c0_52 = arith.constant 0 : index
    %c0_53 = arith.constant 0 : index
    %131 = vector.load %arg5[%c0_52, %c0_53] : memref<8x128xf32, #tpu.memory_space<vmem>>, vector<8x128xf32>
    tpu.vector_store %arg5[%c0_52, %c0_53], %130 {strides = array<i32>} : memref<8x128xf32, #tpu.memory_space<vmem>>, vector<8x128xf32>,
    return
  }
}

</mosaic_0001>

<llo_original>
// kernel: german_net_forward.1
$region0: #{german_net_forward.1}
  #allocation0 [shape = 'u32[]', space=smem, size = 0x4, offset = 0x4, fixed_abs, tag = 'smem constant byte address 0x4 - core index']
  #allocation1 [shape = 'u32[144,128]{1,0:T(1,128)}', space=vmem, size = 0x12000, scoped, tag = 'internal scratch']
  #allocation2 [shape = 'f32[8,128]{1,0:T(8,128)}', space=vmem, size = 0x1000, scoped, tag = 'scratch operand']
  %s0 = inlined_call_operand.vmem [shape: f32[3], index: 0, kind: input, shape index: {}]
  %s1 = inlined_call_operand.hbm [shape: f32[8,23], index: 1, kind: input, shape index: {}]
  %s2 = inlined_call_operand.hbm [shape: f32[4,128,128], index: 2, kind: input, shape index: {}]
  %s3 = inlined_call_operand.hbm [shape: f32[8,128], index: 3, kind: input, shape index: {}]
  %s4 = inlined_call_operand.hbm [shape: f32[8,128], index: 4, kind: output, shape index: {0}]
  %s5 = inlined_call_operand.vmem [shape: f32[8,128], index: 5, kind: output, shape index: {1}]
  %6 = xla_tuple %s4, %s5
  %s7 = sld [smem:[#allocation0]]
  $region50: #{german_net_forward.1} parent=0
    _
  %s9 = ssub.s32 1, %s7
  %s10 = scalar_select 0, %s9, %s7
  $region1: #{german_net_forward.1} parent=0
    #allocation3 [shape = 'u8[512]{0}', space=smem, size = 0x200, scoped, tag = 'input window, operand 0, single buffered']
    #allocation4 [shape = 's32[1]{0}', space=sflag, size = 0x4, scoped, tag = 'scoped memory for german_net_forward.1']
    #allocation5 [shape = 's32[1]{0}', space=sflag, size = 0x4, scoped, tag = 'scoped memory for german_net_forward.1']
    #allocation6 [shape = 's32[1]{0}', space=sflag, size = 0x4, scoped, tag = 'scoped memory for german_net_forward.1']
    #allocation7 [shape = 'u8[4096]{0}', space=vmem, size = 0x1000, scoped, tag = 'input window, operand 1, single buffered']
    #allocation8 [shape = 'u8[262144]{0}', space=vmem, size = 0x40000, scoped, tag = 'input window, operand 2, single buffered']
    #allocation9 [shape = 's32[1]{0}', space=sflag, size = 0x4, scoped, tag = 'scoped memory for german_net_forward.1']
    #allocation10 [shape = 'u8[4096]{0}', space=vmem, size = 0x1000, scoped, tag = 'input window, operand 3, single buffered']
    #allocation11 [shape = 'u8[4096]{0}', space=vmem, size = 0x1000, scoped, tag = 'output window, operand 0, single buffered']
    %11 = vsyncpa [#allocation6], 0
    %12 = vsyncpa [#allocation4], 0
    %13 = vsyncpa [#allocation9], 0
    %14 = vsyncpa [#allocation5], 0
    // Predicated region
    $region2: #{german_net_forward.1} parent=1 // pred_check
      _
    $region3: #{german_net_forward.1} parent=1 // pred_check_branch
      %16 = sbr.rel (0) target = $region5
    $region4: #{german_net_forward.1} parent=1 // pred_region
      %s18 = ssub.s32 16, 16
      %19 = vsyncadd [#allocation6], %s18
      %s21 = sshll.u32 %s0, 4
      %s22 = int_to_ptr.vmem [resolvable:$true] %s21
      %24 = dma.vmem_to_smem %s22, 16, [#allocation3], [#allocation6]
    $region5: #{german_net_forward.1} parent=1 // pred_fallthru
      _
    // Predicated region
    $region6: #{german_net_forward.1} parent=1 // pred_check
      _
    $region7: #{german_net_forward.1} parent=1 // pred_check_branch
      %26 = sbr.rel (0) target = $region9
    $region8: #{german_net_forward.1} parent=1 // pred_region
      %s28 = ssub.s32 128, 128
      %29 = vsyncadd [#allocation4], %s28
      %s31 = sshll.u32 [#allocation7], 4
      %s32 = int_to_ptr.vmem [resolvable:$true] %s31
      %34 = dma.hbm_to_vmem [thread:$0]  %s1, 128, %s32, [#allocation4]
    $region9: #{german_net_forward.1} parent=1 // pred_fallthru
      _
    // Predicated region
    $region10: #{german_net_forward.1} parent=1 // pred_check
      _
    $region11: #{german_net_forward.1} parent=1 // pred_check_branch
      %36 = sbr.rel (0) target = $region13
    $region12: #{german_net_forward.1} parent=1 // pred_region
      %s38 = ssub.s32 8192, 8192
      %39 = vsyncadd [#allocation9], %s38
      %s40 = sshll.u32 [#allocation8], 4
      %s41 = int_to_ptr.vmem [resolvable:$true] %s40
      %46 = dma.hbm_to_vmem [thread:$0]  %s2, 8192, %s41, [#allocation9], 128, 128, 8
    $region13: #{german_net_forward.1} parent=1 // pred_fallthru
      _
    // Predicated region
    $region14: #{german_net_forward.1} parent=1 // pred_check
      _
    $region15: #{german_net_forward.1} parent=1 // pred_check_branch
      %48 = sbr.rel (0) target = $region17
    $region16: #{german_net_forward.1} parent=1 // pred_region
      %s50 = ssub.s32 128, 128
      %51 = vsyncadd [#allocation9], %s50
      %s53 = sshll.u32 [#allocation10], 4
      %s54 = int_to_ptr.vmem [resolvable:$true] %s53
      %56 = dma.hbm_to_vmem [thread:$0]  %s3, 128, %s54, [#allocation9]
    $region17: #{german_net_forward.1} parent=1 // pred_fallthru
      _
    // Predicated region
    $region18: #{german_net_forward.1} parent=1 // pred_check
      _
    $region19: #{german_net_forward.1} parent=1 // pred_check_branch
      %58 = sbr.rel (0) target = $region21
    $region20: #{german_net_forward.1} parent=1 // pred_region
      %59 = dma.done [#allocation6], 16
    $region21: #{german_net_forward.1} parent=1 // pred_fallthru
      _
    // Predicated region
    $region22: #{german_net_forward.1} parent=1 // pred_check
      _
    $region23: #{german_net_forward.1} parent=1 // pred_check_branch
      %61 = sbr.rel (0) target = $region25
    $region24: #{german_net_forward.1} parent=1 // pred_region
      %62 = dma.done [#allocation4], 128
    $region25: #{german_net_forward.1} parent=1 // pred_fallthru
      _
    // Predicated region
    $region26: #{german_net_forward.1} parent=1 // pred_check
      _
    $region27: #{german_net_forward.1} parent=1 // pred_check_branch
      %64 = sbr.rel (0) target = $region29
    $region28: #{german_net_forward.1} parent=1 // pred_region
      %65 = dma.done [#allocation9], 8192
    $region29: #{german_net_forward.1} parent=1 // pred_fallthru
      _
    // Predicated region
    $region30: #{german_net_forward.1} parent=1 // pred_check
      _
    $region31: #{german_net_forward.1} parent=1 // pred_check_branch
      %67 = sbr.rel (0) target = $region33
    $region32: #{german_net_forward.1} parent=1 // pred_region
      %68 = dma.done [#allocation9], 128
    $region33: #{german_net_forward.1} parent=1 // pred_fallthru
      _
    %69 = sfence
    %s70 = sld [smem:[#allocation3]]
    %s71 = sld [smem:[#allocation3 + $0x1]]
    %s72 = sld [smem:[#allocation3 + $0x2]]
    %73 = vst [vmem:[#allocation2] sm:$0xff] 0.0
    %v74 = vld [vmem:[#allocation7] sm:$0xff]
    %vm75 = vcmask 187392
    %76 = vst.msk [vmem:[#allocation2] sm:$0xff] %vm75, %v74
    %v77 = vld [vmem:[#allocation2] sm:$0xff]
    %v78 = vld [vmem:[#allocation10] sm:$0xff]
    %v79 = vld [vmem:[#allocation8] sm:$0xff]
    %v80 = vld [vmem:[#allocation8 + $0x8] sm:$0xff]
    %v81 = vld [vmem:[#allocation8 + $0x10] sm:$0xff]
    %v82 = vld [vmem:[#allocation8 + $0x18] sm:$0xff]
    %v83 = vld [vmem:[#allocation8 + $0x20] sm:$0xff]
    %v84 = vld [vmem:[#allocation8 + $0x28] sm:$0xff]
    %v85 = vld [vmem:[#allocation8 + $0x30] sm:$0xff]
    %v86 = vld [vmem:[#allocation8 + $0x38] sm:$0xff]
    %v87 = vld [vmem:[#allocation8 + $0x40] sm:$0xff]
    %v88 = vld [vmem:[#allocation8 + $0x48] sm:$0xff]
    %v89 = vld [vmem:[#allocation8 + $0x50] sm:$0xff]
    %v90 = vld [vmem:[#allocation8 + $0x58] sm:$0xff]
    %v91 = vld [vmem:[#allocation8 + $0x60] sm:$0xff]
    %v92 = vld [vmem:[#allocation8 + $0x68] sm:$0xff]
    %v93 = vld [vmem:[#allocation8 + $0x70] sm:$0xff]
    %v94 = vld [vmem:[#allocation8 + $0x78] sm:$0xff]
    %95 = vmatprep.subr.mxu0 0.0
    %96 = vmatpush1.msra.mxu0 %v79
    %97 = vmatprep.subr.mxu0 0.0
    %98 = vmatpush1.msra.mxu0 %v80
    %99 = vmatprep.subr.mxu0 0.0
    %100 = vmatpush1.msra.mxu0 %v81
    %101 = vmatprep.subr.mxu0 0.0
    %102 = vmatpush1.msra.mxu0 %v82
    %103 = vmatprep.subr.mxu0 0.0
    %104 = vmatpush1.msra.mxu0 %v83
    %105 = vmatprep.subr.mxu0 0.0
    %106 = vmatpush1.msra.mxu0 %v84
    %107 = vmatprep.subr.mxu0 0.0
    %108 = vmatpush1.msra.mxu0 %v85
    %109 = vmatprep.subr.mxu0 0.0
    %110 = vmatpush1.msra.mxu0 %v86
    %111 = vmatprep.subr.mxu0 0.0
    %112 = vmatpush1.msra.mxu0 %v87
    %113 = vmatprep.subr.mxu0 0.0
    %114 = vmatpush1.msra.mxu0 %v88
    %115 = vmatprep.subr.mxu0 0.0
    %116 = vmatpush1.msra.mxu0 %v89
    %117 = vmatprep.subr.mxu0 0.0
    %118 = vmatpush1.msra.mxu0 %v90
    %119 = vmatprep.subr.mxu0 0.0
    %120 = vmatpush1.msra.mxu0 %v91
    %121 = vmatprep.subr.mxu0 0.0
    %122 = vmatpush1.msra.mxu0 %v92
    %123 = vmatprep.subr.mxu0 0.0
    %124 = vmatpush1.msra.mxu0 %v93
    %125 = vmatprep.subr.mxu0 0.0
    %126 = vmatpush1.msra.mxu0 %v94
    %127 = vmatprep.subr.mxu0 0.0
    %128 = vmatpush1.msra.mxu0 0.0
    %129 = vmatprep.subr.mxu0 0.0
    %130 = vmatpush1.msra.mxu0 0.0
    %131 = vmatprep.subr.mxu0 0.0
    %132 = vmatpush1.msra.mxu0 0.0
    %133 = vmatprep.subr.mxu0 0.0
    %134 = vmatpush1.msra.mxu0 0.0
    %135 = vmatprep.subr.mxu0 0.0
    %136 = vmatpush1.msra.mxu0 0.0
    %137 = vmatprep.subr.mxu0 0.0
    %138 = vmatpush1.msra.mxu0 0.0
    %139 = vmatprep.subr.mxu0 0.0
    %140 = vmatpush1.msra.mxu0 0.0
    %141 = vmatprep.subr.mxu0 0.0
    %142 = vmatpush1.msra.mxu0 0.0
    %143 = vmatprep.subr.mxu0 0.0
    %144 = vmatpush1.msra.mxu0 0.0
    %145 = vmatprep.subr.mxu0 0.0
    %146 = vmatpush1.msra.mxu0 0.0
    %147 = vmatprep.subr.mxu0 0.0
    %148 = vmatpush1.msra.mxu0 0.0
    %149 = vmatprep.subr.mxu0 0.0
    %150 = vmatpush1.msra.mxu0 0.0
    %151 = vmatprep.subr.mxu0 0.0
    %152 = vmatpush1.msra.mxu0 0.0
    %153 = vmatprep.subr.mxu0 0.0
    %154 = vmatpush1.msra.mxu0 0.0
    %155 = vmatprep.subr.mxu0 0.0
    %156 = vmatpush1.msra.mxu0 0.0
    %157 = vmatprep.subr.mxu0 0.0
    %158 = vmatpush1.msra.mxu0 0.0
    %159 = vmatprep.mubr.f32.mxu0 0.0
    %160 = vmatmul.mubr.f32.gmra.mrb[0].mxu0 %v77
    %v161 = vpop.f32.mrb[0].mxu0
    %v162 = vadd.f32 0.0, %v161
    %v163 = vpop.f32.mrb[0].mxu0
    %164 = vdwg.mxu0
    %v165 = vrot.slane %v162, 4
    %v166 = vadd.f32 %v162, %v165
    %v167 = vrot.slane %v166, 2
    %v168 = vadd.f32 %v166, %v167
    %v169 = vrot.slane %v168, 1
    %v170 = vadd.f32 %v168, %v169
    %v171 = vrcp.pop 8.0
    %v172 = vmul.f32 %v170, %v171
    %v173 = vsub.f32 %v162, %v172
    %v174 = vmul.f32 %v173, %v173
    %v175 = vrot.slane %v174, 4
    %v176 = vadd.f32 %v174, %v175
    %v177 = vrot.slane %v176, 2
    %v178 = vadd.f32 %v176, %v177
    %v179 = vrot.slane %v178, 1
    %v180 = vadd.f32 %v178, %v179
    %v181 = vmul.f32 %v180, %v171
    %v182 = vadd.f32 %v181, 1e-05
    %v183 = vrsqrt.pop %v182
    %v184 = vmul.f32 %v78, %v183
    %v185 = vlaneseq
    %v186 = vshrl.u32 %v185, 7
    %v187 = vsub.s32 0, %v186
    %v188 = vrot.slane %v184, %v187
    %v189 = vmul.f32 %v173, %v188
    %v190 = vlaneseq
    %v191 = vshrl.u32 %v190, 7
    %v192 = vsub.s32 1, %v191
    %v193 = vrot.slane %v78, %v192
    %v194 = vadd.f32 %v189, %v193
    %vm195 = vcmp.gt.f32.partialorder %v194, 0.0
    %v196 = vstv %s70
    %v197 = vmul.f32 %v196, %v194
    %v198 = vsel %vm195, %v194, %v197
    %s199 = scalar_lea.vmem [#allocation8], 128
    %v200 = vld [vmem:[%s199] sm:$0xff]
    %v201 = vld [vmem:[%s199 + $0x8] sm:$0xff]
    %v202 = vld [vmem:[%s199 + $0x10] sm:$0xff]
    %v203 = vld [vmem:[%s199 + $0x18] sm:$0xff]
    %v204 = vld [vmem:[%s199 + $0x20] sm:$0xff]
    %v205 = vld [vmem:[%s199 + $0x28] sm:$0xff]
    %v206 = vld [vmem:[%s199 + $0x30] sm:$0xff]
    %v207 = vld [vmem:[%s199 + $0x38] sm:$0xff]
    %v208 = vld [vmem:[%s199 + $0x40] sm:$0xff]
    %v209 = vld [vmem:[%s199 + $0x48] sm:$0xff]
    %v210 = vld [vmem:[%s199 + $0x50] sm:$0xff]
    %v211 = vld [vmem:[%s199 + $0x58] sm:$0xff]
    %v212 = vld [vmem:[%s199 + $0x60] sm:$0xff]
    %v213 = vld [vmem:[%s199 + $0x68] sm:$0xff]
    %v214 = vld [vmem:[%s199 + $0x70] sm:$0xff]
    %v215 = vld [vmem:[%s199 + $0x78] sm:$0xff]
    %216 = vmatprep.subr.mxu0 0.0
    %217 = vmatpush1.msra.mxu0 %v200
    %218 = vmatprep.subr.mxu0 0.0
    %219 = vmatpush1.msra.mxu0 %v201
    %220 = vmatprep.subr.mxu0 0.0
    %221 = vmatpush1.msra.mxu0 %v202
    %222 = vmatprep.subr.mxu0 0.0
    %223 = vmatpush1.msra.mxu0 %v203
    %224 = vmatprep.subr.mxu0 0.0
    %225 = vmatpush1.msra.mxu0 %v204
    %226 = vmatprep.subr.mxu0 0.0
    %227 = vmatpush1.msra.mxu0 %v205
    %228 = vmatprep.subr.mxu0 0.0
    %229 = vmatpush1.msra.mxu0 %v206
    %230 = vmatprep.subr.mxu0 0.0
    %231 = vmatpush1.msra.mxu0 %v207
    %232 = vmatprep.subr.mxu0 0.0
    %233 = vmatpush1.msra.mxu0 %v208
    %234 = vmatprep.subr.mxu0 0.0
    %235 = vmatpush1.msra.mxu0 %v209
    %236 = vmatprep.subr.mxu0 0.0
    %237 = vmatpush1.msra.mxu0 %v210
    %238 = vmatprep.subr.mxu0 0.0
    %239 = vmatpush1.msra.mxu0 %v211
    %240 = vmatprep.subr.mxu0 0.0
    %241 = vmatpush1.msra.mxu0 %v212
    %242 = vmatprep.subr.mxu0 0.0
    %243 = vmatpush1.msra.mxu0 %v213
    %244 = vmatprep.subr.mxu0 0.0
    %245 = vmatpush1.msra.mxu0 %v214
    %246 = vmatprep.subr.mxu0 0.0
    %247 = vmatpush1.msra.mxu0 %v215
    %248 = vmatprep.subr.mxu0 0.0
    %249 = vmatpush1.msra.mxu0 0.0
    %250 = vmatprep.subr.mxu0 0.0
    %251 = vmatpush1.msra.mxu0 0.0
    %252 = vmatprep.subr.mxu0 0.0
    %253 = vmatpush1.msra.mxu0 0.0
    %254 = vmatprep.subr.mxu0 0.0
    %255 = vmatpush1.msra.mxu0 0.0
    %256 = vmatprep.subr.mxu0 0.0
    %257 = vmatpush1.msra.mxu0 0.0
    %258 = vmatprep.subr.mxu0 0.0
    %259 = vmatpush1.msra.mxu0 0.0
    %260 = vmatprep.subr.mxu0 0.0
    %261 = vmatpush1.msra.mxu0 0.0
    %262 = vmatprep.subr.mxu0 0.0
    %263 = vmatpush1.msra.mxu0 0.0
    %264 = vmatprep.subr.mxu0 0.0
    %265 = vmatpush1.msra.mxu0 0.0
    %266 = vmatprep.subr.mxu0 0.0
    %267 = vmatpush1.msra.mxu0 0.0
    %268 = vmatprep.subr.mxu0 0.0
    %269 = vmatpush1.msra.mxu0 0.0
    %270 = vmatprep.subr.mxu0 0.0
    %271 = vmatpush1.msra.mxu0 0.0
    %272 = vmatprep.subr.mxu0 0.0
    %273 = vmatpush1.msra.mxu0 0.0
    %274 = vmatprep.subr.mxu0 0.0
    %275 = vmatpush1.msra.mxu0 0.0
    %276 = vmatprep.subr.mxu0 0.0
    %277 = vmatpush1.msra.mxu0 0.0
    %278 = vmatprep.subr.mxu0 0.0
    %279 = vmatpush1.msra.mxu0 0.0
    %280 = vmatprep.mubr.f32.mxu0 0.0
    %281 = vmatmul.mubr.f32.gmra.mrb[0].mxu0 %v198
    %v282 = vpop.f32.mrb[0].mxu0
    %v283 = vadd.f32 0.0, %v282
    %v284 = vpop.f32.mrb[0].mxu0
    %285 = vdwg.mxu0
    %v286 = vrot.slane %v283, 4
    %v287 = vadd.f32 %v283, %v286
    %v288 = vrot.slane %v287, 2
    %v289 = vadd.f32 %v287, %v288
    %v290 = vrot.slane %v289, 1
    %v291 = vadd.f32 %v289, %v290
    %v292 = vmul.f32 %v291, %v171
    %v293 = vsub.f32 %v283, %v292
    %v294 = vmul.f32 %v293, %v293
    %v295 = vrot.slane %v294, 4
    %v296 = vadd.f32 %v294, %v295
    %v297 = vrot.slane %v296, 2
    %v298 = vadd.f32 %v296, %v297
    %v299 = vrot.slane %v298, 1
    %v300 = vadd.f32 %v298, %v299
    %v301 = vmul.f32 %v300, %v171
    %v302 = vadd.f32 %v301, 1e-05
    %v303 = vrsqrt.pop %v302
    %v304 = vmul.f32 %v78, %v303
    %v305 = vlaneseq
    %v306 = vshrl.u32 %v305, 7
    %v307 = vsub.s32 2, %v306
    %v308 = vrot.slane %v304, %v307
    %v309 = vmul.f32 %v293, %v308
    %v310 = vlaneseq
    %v311 = vshrl.u32 %v310, 7
    %v312 = vsub.s32 3, %v311
    %v313 = vrot.slane %v78, %v312
    %v314 = vadd.f32 %v309, %v313
    %vm315 = vcmp.gt.f32.partialorder %v314, 0.0
    %v316 = vstv %s71
    %v317 = vmul.f32 %v316, %v314
    %v318 = vsel %vm315, %v314, %v317
    %v319 = vrot.slane %v318, 4
    %v320 = vadd.f32 %v318, %v319
    %v321 = vrot.slane %v320, 2
    %v322 = vadd.f32 %v320, %v321
    %v323 = vrot.slane %v322, 1
    %v324 = vadd.f32 %v322, %v323
    %v325 = vmul.f32 %v324, %v171
    %v326 = vsub.f32 %v318, %v325
    %v327 = vmul.f32 %v326, %v326
    %v328 = vrot.slane %v327, 4
    %v329 = vadd.f32 %v327, %v328
    %v330 = vrot.slane %v329, 2
    %v331 = vadd.f32 %v329, %v330
    %v332 = vrot.slane %v331, 1
    %v333 = vadd.f32 %v331, %v332
    %v334 = vmul.f32 %v333, %v171
    %v335 = vadd.f32 %v334, 1e-05
    %v336 = vrsqrt.pop %v335
    %v337 = vmul.f32 %v78, %v336
    %v338 = vlaneseq
    %v339 = vshrl.u32 %v338, 7
    %v340 = vsub.s32 4, %v339
    %v341 = vrot.slane %v337, %v340
    %v342 = vmul.f32 %v326, %v341
    %s343 = scalar_lea.vmem [#allocation8], 256
    %v344 = vld [vmem:[%s343] sm:$0xff]
    %v345 = vld [vmem:[%s343 + $0x8] sm:$0xff]
    %v346 = vld [vmem:[%s343 + $0x10] sm:$0xff]
    %v347 = vld [vmem:[%s343 + $0x18] sm:$0xff]
    %v348 = vld [vmem:[%s343 + $0x20] sm:$0xff]
    %v349 = vld [vmem:[%s343 + $0x28] sm:$0xff]
    %v350 = vld [vmem:[%s343 + $0x30] sm:$0xff]
    %v351 = vld [vmem:[%s343 + $0x38] sm:$0xff]
    %v352 = vld [vmem:[%s343 + $0x40] sm:$0xff]
    %v353 = vld [vmem:[%s343 + $0x48] sm:$0xff]
    %v354 = vld [vmem:[%s343 + $0x50] sm:$0xff]
    %v355 = vld [vmem:[%s343 + $0x58] sm:$0xff]
    %v356 = vld [vmem:[%s343 + $0x60] sm:$0xff]
    %v357 = vld [vmem:[%s343 + $0x68] sm:$0xff]
    %v358 = vld [vmem:[%s343 + $0x70] sm:$0xff]
    %v359 = vld [vmem:[%s343 + $0x78] sm:$0xff]
    %360 = vmatprep.subr.mxu0 0.0
    %361 = vmatpush1.msra.mxu0 %v344
    %362 = vmatprep.subr.mxu0 0.0
    %363 = vmatpush1.msra.mxu0 %v345
    %364 = vmatprep.subr.mxu0 0.0
    %365 = vmatpush1.msra.mxu0 %v346
    %366 = vmatprep.subr.mxu0 0.0
    %367 = vmatpush1.msra.mxu0 %v347
    %368 = vmatprep.subr.mxu0 0.0
    %369 = vmatpush1.msra.mxu0 %v348
    %370 = vmatprep.subr.mxu0 0.0
    %371 = vmatpush1.msra.mxu0 %v349
    %372 = vmatprep.subr.mxu0 0.0
    %373 = vmatpush1.msra.mxu0 %v350
    %374 = vmatprep.subr.mxu0 0.0
    %375 = vmatpush1.msra.mxu0 %v351
    %376 = vmatprep.subr.mxu0 0.0
    %377 = vmatpush1.msra.mxu0 %v352
    %378 = vmatprep.subr.mxu0 0.0
    %379 = vmatpush1.msra.mxu0 %v353
    %380 = vmatprep.subr.mxu0 0.0
    %381 = vmatpush1.msra.mxu0 %v354
    %382 = vmatprep.subr.mxu0 0.0
    %383 = vmatpush1.msra.mxu0 %v355
    %384 = vmatprep.subr.mxu0 0.0
    %385 = vmatpush1.msra.mxu0 %v356
    %386 = vmatprep.subr.mxu0 0.0
    %387 = vmatpush1.msra.mxu0 %v357
    %388 = vmatprep.subr.mxu0 0.0
    %389 = vmatpush1.msra.mxu0 %v358
    %390 = vmatprep.subr.mxu0 0.0
    %391 = vmatpush1.msra.mxu0 %v359
    %392 = vmatprep.subr.mxu0 0.0
    %393 = vmatpush1.msra.mxu0 0.0
    %394 = vmatprep.subr.mxu0 0.0
    %395 = vmatpush1.msra.mxu0 0.0
    %396 = vmatprep.subr.mxu0 0.0
    %397 = vmatpush1.msra.mxu0 0.0
    %398 = vmatprep.subr.mxu0 0.0
    %399 = vmatpush1.msra.mxu0 0.0
    %400 = vmatprep.subr.mxu0 0.0
    %401 = vmatpush1.msra.mxu0 0.0
    %402 = vmatprep.subr.mxu0 0.0
    %403 = vmatpush1.msra.mxu0 0.0
    %404 = vmatprep.subr.mxu0 0.0
    %405 = vmatpush1.msra.mxu0 0.0
    %406 = vmatprep.subr.mxu0 0.0
    %407 = vmatpush1.msra.mxu0 0.0
    %408 = vmatprep.subr.mxu0 0.0
    %409 = vmatpush1.msra.mxu0 0.0
    %410 = vmatprep.subr.mxu0 0.0
    %411 = vmatpush1.msra.mxu0 0.0
    %412 = vmatprep.subr.mxu0 0.0
    %413 = vmatpush1.msra.mxu0 0.0
    %414 = vmatprep.subr.mxu0 0.0
    %415 = vmatpush1.msra.mxu0 0.0
    %416 = vmatprep.subr.mxu0 0.0
    %417 = vmatpush1.msra.mxu0 0.0
    %418 = vmatprep.subr.mxu0 0.0
    %419 = vmatpush1.msra.mxu0 0.0
    %420 = vmatprep.subr.mxu0 0.0
    %421 = vmatpush1.msra.mxu0 0.0
    %422 = vmatprep.subr.mxu0 0.0
    %423 = vmatpush1.msra.mxu0 0.0
    %424 = vmatprep.mubr.f32.mxu0 0.0
    %425 = vmatmul.mubr.f32.gmra.mrb[0].mxu0 %v342
    %v426 = vpop.f32.mrb[0].mxu0
    %v427 = vadd.f32 0.0, %v426
    %v428 = vpop.f32.mrb[0].mxu0
    %429 = vdwg.mxu0
    %v430 = vrot.slane %v427, 4
    %v431 = vadd.f32 %v427, %v430
    %v432 = vrot.slane %v431, 2
    %v433 = vadd.f32 %v431, %v432
    %v434 = vrot.slane %v433, 1
    %v435 = vadd.f32 %v433, %v434
    %v436 = vmul.f32 %v435, %v171
    %v437 = vsub.f32 %v427, %v436
    %v438 = vmul.f32 %v437, %v437
    %v439 = vrot.slane %v438, 4
    %v440 = vadd.f32 %v438, %v439
    %v441 = vrot.slane %v440, 2
    %v442 = vadd.f32 %v440, %v441
    %v443 = vrot.slane %v442, 1
    %v444 = vadd.f32 %v442, %v443
    %v445 = vmul.f32 %v444, %v171
    %v446 = vadd.f32 %v445, 1e-05
    %v447 = vrsqrt.pop %v446
    %v448 = vmul.f32 %v78, %v447
    %v449 = vlaneseq
    %v450 = vshrl.u32 %v449, 7
    %v451 = vsub.s32 5, %v450
    %v452 = vrot.slane %v448, %v451
    %v453 = vmul.f32 %v437, %v452
    %v454 = vlaneseq
    %v455 = vshrl.u32 %v454, 7
    %v456 = vsub.s32 6, %v455
    %v457 = vrot.slane %v78, %v456
    %v458 = vadd.f32 %v453, %v457
    %vm459 = vcmp.gt.f32.partialorder %v458, 0.0
    %v460 = vstv %s72
    %v461 = vmul.f32 %v460, %v458
    %v462 = vsel %vm459, %v458, %v461
    %463 = vst [vmem:[#allocation11] sm:$0xff] %v462
    %s464 = scalar_lea.vmem [#allocation8], 384
    %v465 = vld [vmem:[%s464] sm:$0xff]
    %v466 = vld [vmem:[%s464 + $0x8] sm:$0xff]
    %v467 = vld [vmem:[%s464 + $0x10] sm:$0xff]
    %v468 = vld [vmem:[%s464 + $0x18] sm:$0xff]
    %v469 = vld [vmem:[%s464 + $0x20] sm:$0xff]
    %v470 = vld [vmem:[%s464 + $0x28] sm:$0xff]
    %v471 = vld [vmem:[%s464 + $0x30] sm:$0xff]
    %v472 = vld [vmem:[%s464 + $0x38] sm:$0xff]
    %v473 = vld [vmem:[%s464 + $0x40] sm:$0xff]
    %v474 = vld [vmem:[%s464 + $0x48] sm:$0xff]
    %v475 = vld [vmem:[%s464 + $0x50] sm:$0xff]
    %v476 = vld [vmem:[%s464 + $0x58] sm:$0xff]
    %v477 = vld [vmem:[%s464 + $0x60] sm:$0xff]
    %v478 = vld [vmem:[%s464 + $0x68] sm:$0xff]
    %v479 = vld [vmem:[%s464 + $0x70] sm:$0xff]
    %v480 = vld [vmem:[%s464 + $0x78] sm:$0xff]
    %v481 = vlaneseq
    %v482 = vshrl.u32 %v481, 7
    %v483 = vsub.s32 7, %v482
    %v484 = vrot.slane %v78, %v483
    %485 = vmatprep.subr.mxu0 0.0
    %486 = vmatpush1.msra.mxu0 %v465
    %487 = vmatprep.subr.mxu0 0.0
    %488 = vmatpush1.msra.mxu0 %v466
    %489 = vmatprep.subr.mxu0 0.0
    %490 = vmatpush1.msra.mxu0 %v467
    %491 = vmatprep.subr.mxu0 0.0
    %492 = vmatpush1.msra.mxu0 %v468
    %493 = vmatprep.subr.mxu0 0.0
    %494 = vmatpush1.msra.mxu0 %v469
    %495 = vmatprep.subr.mxu0 0.0
    %496 = vmatpush1.msra.mxu0 %v470
    %497 = vmatprep.subr.mxu0 0.0
    %498 = vmatpush1.msra.mxu0 %v471
    %499 = vmatprep.subr.mxu0 0.0
    %500 = vmatpush1.msra.mxu0 %v472
    %501 = vmatprep.subr.mxu0 0.0
    %502 = vmatpush1.msra.mxu0 %v473
    %503 = vmatprep.subr.mxu0 0.0
    %504 = vmatpush1.msra.mxu0 %v474
    %505 = vmatprep.subr.mxu0 0.0
    %506 = vmatpush1.msra.mxu0 %v475
    %507 = vmatprep.subr.mxu0 0.0
    %508 = vmatpush1.msra.mxu0 %v476
    %509 = vmatprep.subr.mxu0 0.0
    %510 = vmatpush1.msra.mxu0 %v477
    %511 = vmatprep.subr.mxu0 0.0
    %512 = vmatpush1.msra.mxu0 %v478
    %513 = vmatprep.subr.mxu0 0.0
    %514 = vmatpush1.msra.mxu0 %v479
    %515 = vmatprep.subr.mxu0 0.0
    %516 = vmatpush1.msra.mxu0 %v480
    %517 = vmatprep.subr.mxu0 0.0
    %518 = vmatpush1.msra.mxu0 0.0
    %519 = vmatprep.subr.mxu0 0.0
    %520 = vmatpush1.msra.mxu0 0.0
    %521 = vmatprep.subr.mxu0 0.0
    %522 = vmatpush1.msra.mxu0 0.0
    %523 = vmatprep.subr.mxu0 0.0
    %524 = vmatpush1.msra.mxu0 0.0
    %525 = vmatprep.subr.mxu0 0.0
    %526 = vmatpush1.msra.mxu0 0.0
    %527 = vmatprep.subr.mxu0 0.0
    %528 = vmatpush1.msra.mxu0 0.0
    %529 = vmatprep.subr.mxu0 0.0
    %530 = vmatpush1.msra.mxu0 0.0
    %531 = vmatprep.subr.mxu0 0.0
    %532 = vmatpush1.msra.mxu0 0.0
    %533 = vmatprep.subr.mxu0 0.0
    %534 = vmatpush1.msra.mxu0 0.0
    %535 = vmatprep.subr.mxu0 0.0
    %536 = vmatpush1.msra.mxu0 0.0
    %537 = vmatprep.subr.mxu0 0.0
    %538 = vmatpush1.msra.mxu0 0.0
    %539 = vmatprep.subr.mxu0 0.0
    %540 = vmatpush1.msra.mxu0 0.0
    %541 = vmatprep.subr.mxu0 0.0
    %542 = vmatpush1.msra.mxu0 0.0
    %543 = vmatprep.subr.mxu0 0.0
    %544 = vmatpush1.msra.mxu0 0.0
    %545 = vmatprep.subr.mxu0 0.0
    %546 = vmatpush1.msra.mxu0 0.0
    %547 = vmatprep.subr.mxu0 0.0
    %548 = vmatpush1.msra.mxu0 0.0
    %549 = vmatprep.mubr.f32.mxu0 0.0
    %550 = vmatmul.mubr.f32.gmra.mrb[0].mxu0 %v462
    %v551 = vpop.f32.mrb[0].mxu0
    %v552 = vadd.f32 %v484, %v551
    %v553 = vpop.f32.mrb[0].mxu0
    %554 = vdwg.mxu0
    %555 = vmax.xlane.f32.xlu0 %v552
    %v556 = vpop.xlane.xlu0 %555
    %v557 = vsub.f32 %v552, %v556
    %v558 = vmul.f32 %v557, 1.442695
    %v559 = vpow.pop %v558
    %560 = vadd.xlane.f32.xlu0 %v559
    %v561 = vpop.xlane.xlu0 %560
    %v562 = vlog2.pop %v561
    %v563 = vmul.f32 %v562, 0.6931472
    %v564 = vsub.f32 %v557, %v563
    %565 = vst [vmem:[%s5] sm:$0xff] %v564
    // Predicated region
    $region34: #{german_net_forward.1} parent=1 // pred_check
      _
    $region35: #{german_net_forward.1} parent=1 // pred_check_branch
      %567 = sbr.rel (0) target = $region37
    $region36: #{german_net_forward.1} parent=1 // pred_region
      %s569 = ssub.s32 128, 128
      %570 = vsyncadd [#allocation5], %s569
      %s572 = sshll.u32 [#allocation11], 4
      %s573 = int_to_ptr.vmem [resolvable:$true] %s572
      %575 = dma.vmem_to_hbm [thread:$0]  %s573, 128, %s4, [#allocation5]
    $region37: #{german_net_forward.1} parent=1 // pred_fallthru
      _
    // Predicated region
    $region38: #{german_net_forward.1} parent=1 // pred_check
      _
    $region39: #{german_net_forward.1} parent=1 // pred_check_branch
      %577 = sbr.rel (0) target = $region41
    $region40: #{german_net_forward.1} parent=1 // pred_region
      _
    $region41: #{german_net_forward.1} parent=1 // pred_fallthru
      _
    // Predicated region
    $region42: #{german_net_forward.1} parent=1 // pred_check
      _
    $region43: #{german_net_forward.1} parent=1 // pred_check_branch
      %579 = sbr.rel (0) target = $region45
    $region44: #{german_net_forward.1} parent=1 // pred_region
      %580 = dma.done [#allocation5], 128
    $region45: #{german_net_forward.1} parent=1 // pred_fallthru
      _
    // Predicated region
    $region46: #{german_net_forward.1} parent=1 // pred_check
      _
    $region47: #{german_net_forward.1} parent=1 // pred_check_branch
      %582 = sbr.rel (0) target = $region49
    $region48: #{german_net_forward.1} parent=1 // pred_region
      _
    $region49: #{german_net_forward.1} parent=1 // pred_fallthru
      _
    %583 = vsyncpa [#allocation4], 1
    %584 = vsyncpa [#allocation9], 1
    %585 = vsyncpa [#allocation5], 1
    %586 = vsyncpa [#allocation6], 1

</llo_original>
